<compile_context>
chip_gen: v5e
topology: v5e:2x2
jax: 0.10.0
libtpu: 0.0.40
codegen_flags: <defaults>
</compile_context>

<pallas_src>
import functools

import jax
import jax.numpy as jnp
from jax import lax
from jax.experimental import pallas as pl
from jax.experimental.pallas import tpu as pltpu


def _round_up(x, m):
    return (x + m - 1) // m * m


def _choose_tiles(B, C, HW, itemsize, target_bytes=4 * 1024 * 1024):
    """Pick (bt, tile_hw) so an x block is ~target_bytes and layout-legal."""
    bt_min = B if B <= 8 else 8          # (bt, C) output block: bt == B or 8k
    spatial_bytes = C * HW * itemsize    # one batch element, full spatial extent

    if spatial_bytes * bt_min <= target_bytes:
        # Whole spatial extent fits: take full HW rows, fatten the batch tile.
        tile_hw = HW
        bt = min(B, max(bt_min, target_bytes // max(spatial_bytes, 1)))
        if bt < B:
            bt = max(bt_min, (bt // 8) * 8)
    else:
        # Split the spatial axis into lane-aligned (multiple-of-128) chunks.
        tile_hw = max(128, (target_bytes // (bt_min * C * itemsize)) // 128 * 128)
        tile_hw = min(tile_hw, HW)       # == HW only when HW < 128 (full dim)
        bt = bt_min

    # Megacore: prefer >=2 grid points on the parallel batch axis when the
    # batch can be split into aligned tiles (no effect on v5e/v6e).
    if B > 8 and bt > (B + 1) // 2:
        bt = max(8, _round_up((B + 1) // 2, 8))

    return bt, tile_hw


def senet_kernel(x_ref, w1t_ref, w2t_ref, b2_ref, out_ref, acc_ref, *,
                 hw, tile_hw, inv_hw):
    s = pl.program_id(1)
    n_s = pl.num_programs(1)

    # --- init the (bt, C) accumulator on the first spatial tile ---
    @pl.when(s == 0)
    def _init():
        acc_ref[...] = jnp.zeros_like(acc_ref)

    ragged = (hw % tile_hw) != 0   # static: only trace the mask when needed

    if ragged:
        @pl.when(s == n_s - 1)
        def _acc_masked():
            rem = hw - s * tile_hw
            lane = lax.broadcasted_iota(jnp.int32, x_ref.shape, 2)
            xt = jnp.where(lane < rem, x_ref[...].astype(jnp.float32), 0.0)
            acc_ref[...] += jnp.sum(xt, axis=-1)

        @pl.when(s != n_s - 1)
        def _acc_full():
            acc_ref[...] += jnp.sum(x_ref[...].astype(jnp.float32), axis=-1)
    else:
        acc_ref[...] += jnp.sum(x_ref[...].astype(jnp.float32), axis=-1)

    # --- epilogue: two tiny FC layers + sigmoid, once per batch tile ---
    @pl.when(s == n_s - 1)
    def _epilogue():
        pooled = acc_ref[...] * inv_hw                               # (bt, C)
        h = jnp.dot(pooled, w1t_ref[...],
                    preferred_element_type=jnp.float32)              # (bt, Hd_pad)
        h = jnp.maximum(h, 0.0)
        y = jnp.dot(h, w2t_ref[...],
                    preferred_element_type=jnp.float32)              # (bt, C)
        y = y + b2_ref[...]                                          # (1, C) bcast
        out_ref[...] = (1.0 / (1.0 + jnp.exp(-y))).astype(out_ref.dtype)


def senet_forward(x_nchw, w1, w2, b2):
    """x_nchw: (B, C, H, W); w1: (Hd, C); w2: (C, Hd); b2: (C,) -> (B, C, 1, 1)."""
    B, C, H, W = x_nchw.shape
    Hd = w1.shape[0]
    HW = H * W
    itemsize = jnp.dtype(x_nchw.dtype).itemsize

    bt, tile_hw = _choose_tiles(B, C, HW, itemsize)
    grid = (pl.cdiv(B, bt), pl.cdiv(HW, tile_hw))

    # (B, C, H, W) -> (B, C, H*W): contiguous merge of the last two dims, free.
    x_flat = x_nchw.reshape(B, C, HW)

    # Tiny resident weights, pre-transposed; hidden dim zero-padded to a lane
    # multiple (mathematically inert through relu / zero rows of w2t).
    hd_pad = _round_up(Hd, 128)
    w1t = jnp.pad(w1.astype(jnp.float32).T, ((0, 0), (0, hd_pad - Hd)))   # (C, Hd_pad)
    w2t = jnp.pad(w2.astype(jnp.float32).T, ((0, hd_pad - Hd), (0, 0)))   # (Hd_pad, C)
    b2_2d = b2.reshape(1, C).astype(jnp.float32)

    cost = pl.CostEstimate(
        flops=int(B * C * HW) + 4 * int(B * C * hd_pad),
        transcendentals=int(B * C),
        bytes_accessed=int(x_flat.size * itemsize
                           + (w1t.size + w2t.size + b2_2d.size + B * C) * 4),
    )

    kernel = functools.partial(senet_kernel, hw=HW, tile_hw=tile_hw,
                               inv_hw=1.0 / float(HW))

    out = pl.pallas_call(
        kernel,
        out_shape=jax.ShapeDtypeStruct((B, C), jnp.float32),
        grid_spec=pltpu.PrefetchScalarGridSpec(
            num_scalar_prefetch=0,
            grid=grid,
            in_specs=[
                # x tile: (bt, C, tile_hw) streamed along the spatial axis.
                pl.BlockSpec((bt, C, tile_hw), lambda b, s: (b, 0, s)),
                # Small weights stay resident (same block for every grid step).
                pl.BlockSpec((C, hd_pad), lambda b, s: (0, 0)),
                pl.BlockSpec((hd_pad, C), lambda b, s: (0, 0)),
                pl.BlockSpec((1, C), lambda b, s: (0, 0)),
            ],
            out_specs=pl.BlockSpec((bt, C), lambda b, s: (b, 0)),
            scratch_shapes=[pltpu.VMEM((bt, C), jnp.float32)],
        ),
        compiler_params=pltpu.CompilerParams(
            dimension_semantics=("parallel", "arbitrary"),
            vmem_limit_bytes=48 * 1024 * 1024,
        ),
        cost_estimate=cost,
    )(x_flat, w1t, w2t, b2_2d)

    return out.reshape(B, C, 1, 1)


def senet_reference(x_nchw, w1, w2, b2):
    """Pure-JAX reference mirroring the PyTorch forward."""
    pooled = jnp.mean(x_nchw.astype(jnp.float32), axis=(2, 3))   # (B, C)
    h = jnp.maximum(pooled @ w1.T, 0.0)                          # (B, Hd)
    y = h @ w2.T + b2[None, :]                                   # (B, C)
    return jax.nn.sigmoid(y)[:, :, None, None]                   # (B, C, 1, 1)


if __name__ == "__main__":
    # Small deterministic setup consistent with the module:
    # in_planes = 16, ratios = 1/8  ->  hidden_planes = int(16/8) + 1 = 3
    B, C, H, W = 2, 16, 16, 16
    ratios = 1.0 / 8
    Hd = int(C * ratios) + 1

    key = jax.random.PRNGKey(0)
    kx, kw1, kw2, kb2 = jax.random.split(key, 4)

    x = jax.random.normal(kx, (B, C, H, W), dtype=jnp.float32)
    # Conv2d(C, Hd, 1, bias=False).weight has shape (Hd, C, 1, 1) -> (Hd, C)
    w1 = jax.random.normal(kw1, (Hd, C), dtype=jnp.float32) * 0.1
    # Conv2d(Hd, C, 1, bias=True).weight has shape (C, Hd, 1, 1) -> (C, Hd)
    w2 = jax.random.normal(kw2, (C, Hd), dtype=jnp.float32) * 0.1
    b2 = jax.random.normal(kb2, (C,), dtype=jnp.float32) * 0.1

    out = jax.block_until_ready(senet_forward(x, w1, w2, b2))
    ref = jax.block_until_ready(senet_reference(x, w1, w2, b2))

    assert out.shape == (B, C, 1, 1), out.shape
    assert jnp.allclose(out, ref, atol=1e-5, rtol=1e-5), (
        float(jnp.max(jnp.abs(out - ref)))
    )
    print("KERNEL_OK")
</pallas_src>

<mosaic_0001>
module attributes {stable_mosaic.version = 11 : i64} {
  func.func @senet_kernel(%arg0: i32, %arg1: i32, %arg2: memref<2x16x256xf32, #tpu.memory_space<vmem>>, %arg3: memref<16x128xf32, #tpu.memory_space<vmem>>, %arg4: memref<128x16xf32, #tpu.memory_space<vmem>>, %arg5: memref<1x16xf32, #tpu.memory_space<vmem>>, %arg6: memref<2x16xf32, #tpu.memory_space<vmem>>, %arg7: memref<2x16xf32, #tpu.memory_space<vmem>>) attributes {dimension_semantics = [#tpu.dimension_semantics<parallel>, #tpu.dimension_semantics<arbitrary>], iteration_bounds = array<i64: 1, 1>, scalar_prefetch = 0 : i64, scratch_operands = 1 : i64, tpu.core_type = #tpu.core_type<tc>, window_params = [{transform_indices = @transform_0, window_bounds = array<i64: 2, 16, 256>}, {pipeline_mode = #tpu.pipeline_mode<synchronous>, transform_indices = @transform_1, window_bounds = array<i64: 16, 128>}, {pipeline_mode = #tpu.pipeline_mode<synchronous>, transform_indices = @transform_2, window_bounds = array<i64: 128, 16>}, {pipeline_mode = #tpu.pipeline_mode<synchronous>, transform_indices = @transform_3, window_bounds = array<i64: 1, 16>}, {transform_indices = @transform_4, window_bounds = array<i64: 2, 16>}]} {
    %c0_i32 = arith.constant 0 : i32
    %0 = arith.cmpi eq, %arg1, %c0_i32 : i32
    %1 = arith.extui %0 : i1 to i32
    %c0_i32_0 = arith.constant 0 : i32
    %2 = arith.cmpi ne, %1, %c0_i32_0 : i32
    scf.if %2 {
      %cst_9 = arith.constant 0.000000e+00 : f32
      %11 = vector.broadcast %cst_9 : f32 to vector<2x16xf32>
      %c0_10 = arith.constant 0 : index
      %c0_11 = arith.constant 0 : index
      %12 = vector.load %arg7[%c0_10, %c0_11] : memref<2x16xf32, #tpu.memory_space<vmem>>, vector<2x16xf32>
      tpu.vector_store %arg7[%c0_10, %c0_11], %11 {strides = array<i32>} : memref<2x16xf32, #tpu.memory_space<vmem>>, vector<2x16xf32>,
    } else {
    }
    %c0 = arith.constant 0 : index
    %c0_1 = arith.constant 0 : index
    %3 = vector.load %arg7[%c0, %c0_1] : memref<2x16xf32, #tpu.memory_space<vmem>>, vector<2x16xf32>
    %c0_2 = arith.constant 0 : index
    %c0_3 = arith.constant 0 : index
    %c0_4 = arith.constant 0 : index
    %4 = vector.load %arg2[%c0_2, %c0_3, %c0_4] : memref<2x16x256xf32, #tpu.memory_space<vmem>>, vector<2x16x256xf32>
    %cst = arith.constant dense<0.000000e+00> : vector<2x16xf32>
    %5 = vector.multi_reduction <add>, %4, %cst [2] : vector<2x16x256xf32> to vector<2x16xf32>
    %6 = arith.addf %3, %5 : vector<2x16xf32>
    %c0_5 = arith.constant 0 : index
    %c0_6 = arith.constant 0 : index
    %7 = vector.load %arg7[%c0_5, %c0_6] : memref<2x16xf32, #tpu.memory_space<vmem>>, vector<2x16xf32>
    tpu.vector_store %arg7[%c0_5, %c0_6], %6 {strides = array<i32>} : memref<2x16xf32, #tpu.memory_space<vmem>>, vector<2x16xf32>,
    %c0_i32_7 = arith.constant 0 : i32
    %8 = arith.cmpi eq, %arg1, %c0_i32_7 : i32
    %9 = arith.extui %8 : i1 to i32
    %c0_i32_8 = arith.constant 0 : i32
    %10 = arith.cmpi ne, %9, %c0_i32_8 : i32
    scf.if %10 {
      %c0_9 = arith.constant 0 : index
      %c0_10 = arith.constant 0 : index
      %11 = vector.load %arg7[%c0_9, %c0_10] : memref<2x16xf32, #tpu.memory_space<vmem>>, vector<2x16xf32>
      %cst_11 = arith.constant 3.906250e-03 : f32
      %12 = vector.broadcast %cst_11 : f32 to vector<2x16xf32>
      %13 = arith.mulf %11, %12 : vector<2x16xf32>
      %c0_12 = arith.constant 0 : index
      %c0_13 = arith.constant 0 : index
      %14 = vector.load %arg3[%c0_12, %c0_13] : memref<16x128xf32, #tpu.memory_space<vmem>>, vector<16x128xf32>
      %cst_14 = arith.constant dense<0.000000e+00> : vector<2x128xf32>
      %15 = tpu.matmul %13, %14, %cst_14 {dimension_numbers = #tpu.dot_dimension_numbers<[1], [0], [0], [1], [0, 0, 1, 1], [], []>} : vector<2x16xf32>, vector<16x128xf32>, vector<2x128xf32> -> vector<2x128xf32>
      %cst_15 = arith.constant 0.000000e+00 : f32
      %16 = vector.broadcast %cst_15 : f32 to vector<2x128xf32>
      %17 = arith.maximumf %15, %16 : vector<2x128xf32>
      %c0_16 = arith.constant 0 : index
      %c0_17 = arith.constant 0 : index
      %18 = vector.load %arg4[%c0_16, %c0_17] : memref<128x16xf32, #tpu.memory_space<vmem>>, vector<128x16xf32>
      %cst_18 = arith.constant dense<0.000000e+00> : vector<2x16xf32>
      %19 = tpu.matmul %17, %18, %cst_18 {dimension_numbers = #tpu.dot_dimension_numbers<[1], [0], [0], [1], [0, 0, 1, 1], [], []>} : vector<2x128xf32>, vector<128x16xf32>, vector<2x16xf32> -> vector<2x16xf32>
      %c0_19 = arith.constant 0 : index
      %c0_20 = arith.constant 0 : index
      %20 = vector.load %arg5[%c0_19, %c0_20] : memref<1x16xf32, #tpu.memory_space<vmem>>, vector<1x16xf32>
      %21 = vector.broadcast %20 : vector<1x16xf32> to vector<2x16xf32>
      %22 = arith.addf %19, %21 : vector<2x16xf32>
      %cst_21 = arith.constant 0.000000e+00 : f32
      %23 = vector.broadcast %cst_21 : f32 to vector<2x16xf32>
      %24 = arith.subf %23, %22 : vector<2x16xf32>
      %25 = math.exp %24 : vector<2x16xf32>
      %cst_22 = arith.constant 1.000000e+00 : f32
      %26 = vector.broadcast %cst_22 : f32 to vector<2x16xf32>
      %27 = arith.addf %26, %25 : vector<2x16xf32>
      %cst_23 = arith.constant 1.000000e+00 : f32
      %28 = vector.broadcast %cst_23 : f32 to vector<2x16xf32>
      %29 = arith.divf %28, %27 : vector<2x16xf32>
      %c0_24 = arith.constant 0 : index
      %c0_25 = arith.constant 0 : index
      %30 = vector.load %arg6[%c0_24, %c0_25] : memref<2x16xf32, #tpu.memory_space<vmem>>, vector<2x16xf32>
      tpu.vector_store %arg6[%c0_24, %c0_25], %29 {strides = array<i32>} : memref<2x16xf32, #tpu.memory_space<vmem>>, vector<2x16xf32>,
    } else {
    }
    return
  }
  func.func @transform_0(%arg0: i32, %arg1: i32) -> (i32, i32, i32) {
    %c0_i32 = arith.constant 0 : i32
    %c0_i32_0 = arith.constant 0 : i32
    return %arg0, %c0_i32, %arg1 : i32, i32, i32
  }
  func.func @transform_1(%arg0: i32, %arg1: i32) -> (i32, i32) {
    %c0_i32 = arith.constant 0 : i32
    %c0_i32_0 = arith.constant 0 : i32
    %c0_i32_1 = arith.constant 0 : i32
    return %c0_i32, %c0_i32_0 : i32, i32
  }
  func.func @transform_2(%arg0: i32, %arg1: i32) -> (i32, i32) {
    %c0_i32 = arith.constant 0 : i32
    %c0_i32_0 = arith.constant 0 : i32
    %c0_i32_1 = arith.constant 0 : i32
    return %c0_i32, %c0_i32_0 : i32, i32
  }
  func.func @transform_3(%arg0: i32, %arg1: i32) -> (i32, i32) {
    %c0_i32 = arith.constant 0 : i32
    %c0_i32_0 = arith.constant 0 : i32
    %c0_i32_1 = arith.constant 0 : i32
    return %c0_i32, %c0_i32_0 : i32, i32
  }
  func.func @transform_4(%arg0: i32, %arg1: i32) -> (i32, i32) {
    %c0_i32 = arith.constant 0 : i32
    %c0_i32_0 = arith.constant 0 : i32
    return %arg0, %c0_i32 : i32, i32
  }
}

</mosaic_0001>

<llo_original>
// kernel: tpu_custom_call.1
$region0: #{tpu_custom_call.1}
  #allocation0 [shape = 'u32[]', space=smem, size = 0x4, offset = 0x4, fixed_abs, tag = 'smem constant byte address 0x4 - core index']
  #allocation1 [shape = 'u32[72,128]{1,0:T(1,128)}', space=vmem, size = 0x9000, scoped, tag = 'internal scratch']
  #allocation2 [shape = 'f32[2,16]{1,0:T(2,128)}', space=vmem, size = 0x400, scoped, tag = 'scratch operand']
  %s0 = inlined_call_operand.vmem [shape: f32[2,16,256], index: 0, kind: input, shape index: {}]
  %s1 = inlined_call_operand.vmem [shape: f32[16,128], index: 1, kind: input, shape index: {}]
  %s2 = inlined_call_operand.vmem [shape: f32[128,16], index: 2, kind: input, shape index: {}]
  %s3 = inlined_call_operand.vmem [shape: f32[1,16], index: 3, kind: input, shape index: {}]
  %s4 = inlined_call_operand.hbm [shape: f32[2,16], index: 4, kind: output, shape index: {}]
  %s5 = sld [smem:[#allocation0]]
  $region34: #{tpu_custom_call.1} parent=0
    _
  %s7 = ssub.s32 1, %s5
  %s8 = scalar_select 0, %s7, %s5
  $region1: #{tpu_custom_call.1} parent=0
    #allocation3 [shape = 'u8[1024]{0}', space=vmem, size = 0x400, scoped, tag = 'output window, operand 0, single buffered']
    #allocation4 [shape = 's32[1]{0}', space=sflag, size = 0x4, scoped, tag = 'scoped memory for tpu_custom_call.1']
    %9 = vsyncpa [#allocation4], 0
    // Predicated region
    $region2: #{tpu_custom_call.1} parent=1 // pred_check
      _
    $region3: #{tpu_custom_call.1} parent=1 // pred_check_branch
      %11 = sbr.rel (0) target = $region5
    $region4: #{tpu_custom_call.1} parent=1 // pred_region
      _
    $region5: #{tpu_custom_call.1} parent=1 // pred_fallthru
      _
    // Predicated region
    $region6: #{tpu_custom_call.1} parent=1 // pred_check
      _
    $region7: #{tpu_custom_call.1} parent=1 // pred_check_branch
      %13 = sbr.rel (0) target = $region9
    $region8: #{tpu_custom_call.1} parent=1 // pred_region
      _
    $region9: #{tpu_custom_call.1} parent=1 // pred_fallthru
      _
    // Predicated region
    $region10: #{tpu_custom_call.1} parent=1 // pred_check
      _
    $region11: #{tpu_custom_call.1} parent=1 // pred_check_branch
      %15 = sbr.rel (0) target = $region13
    $region12: #{tpu_custom_call.1} parent=1 // pred_region
      _
    $region13: #{tpu_custom_call.1} parent=1 // pred_fallthru
      _
    // Predicated region
    $region14: #{tpu_custom_call.1} parent=1 // pred_check
      _
    $region15: #{tpu_custom_call.1} parent=1 // pred_check_branch
      %17 = sbr.rel (0) target = $region17
    $region16: #{tpu_custom_call.1} parent=1 // pred_region
      _
    $region17: #{tpu_custom_call.1} parent=1 // pred_fallthru
      _
    %p18 = scmp.eq.s32.totalorder 0, 0
    // Predicated region
    $region18: #{tpu_custom_call.1} parent=1 // pred_check
      %p19 = pneg %p18
    $region19: #{tpu_custom_call.1} parent=1 // pred_check_branch
      %21 = sbr.rel (%p19) target = $region21
    $region20: #{tpu_custom_call.1} parent=1 // pred_region
      %vm22 = vcmask 123904
      %23 = vst.msk [vmem:[#allocation2] sm:$0x3] %vm22, 0.0
    $region21: #{tpu_custom_call.1} parent=1 // pred_fallthru
      _
    %v24 = vld [vmem:[#allocation2] sm:$0x3]
    %v25 = vld [vmem:[%s0] sm:$0xff]
    %v26 = vld [vmem:[%s0 + $0x8] sm:$0xff]
    %v27 = vld [vmem:[%s0 + $0x10] sm:$0xff]
    %v28 = vld [vmem:[%s0 + $0x18] sm:$0xff]
    %v29 = vld [vmem:[%s0 + $0x20] sm:$0xff]
    %v30 = vld [vmem:[%s0 + $0x28] sm:$0xff]
    %v31 = vld [vmem:[%s0 + $0x30] sm:$0xff]
    %v32 = vld [vmem:[%s0 + $0x38] sm:$0xff]
    %v33 = vadd.f32 %v25, %v26
    %34 = vadd.xlane.f32.xlu0 %v33
    %v35 = vpop.xlane.xlu0 %34
    %v36 = vadd.f32 %v27, %v28
    %37 = vadd.xlane.f32.xlu0 %v36
    %v38 = vpop.xlane.xlu0 %37
    %v39 = vadd.f32 %v29, %v30
    %40 = vadd.xlane.f32.xlu0 %v39
    %v41 = vpop.xlane.xlu0 %40
    %v42 = vadd.f32 %v31, %v32
    %43 = vadd.xlane.f32.xlu0 %v42
    %v44 = vpop.xlane.xlu0 %43
    %v49 = vlaneseq
    %v50 = vand.u32 %v49, 127
    %v51 = vperm.slane %v35, %v50
    %v52 = vadd.s32 %v50, 4294967288
    %v53 = vperm.slane %v38, %v52
    %vm54 = vcmask 130112
    %v55 = vsel %vm54, %v53, %v51
    %v56 = vperm.slane %v41, %v50
    %v57 = vperm.slane %v44, %v52
    %v58 = vsel %vm54, %v57, %v56
    %vm59 = vcmask 1041409
    %v60 = vsel %vm59, %v58, %v55
    %v62 = vadd.f32 %v24, %v60
    %vm63 = vcmask 123904
    %64 = vst.msk [vmem:[#allocation2] sm:$0x3] %vm63, %v62
    // Predicated region
    $region22: #{tpu_custom_call.1} parent=1 // pred_check
      %p65 = pneg %p18
    $region23: #{tpu_custom_call.1} parent=1 // pred_check_branch
      %67 = sbr.rel (%p65) target = $region25
    $region24: #{tpu_custom_call.1} parent=1 // pred_region
      %v68 = vld [vmem:[#allocation2] sm:$0x3]
      %v69 = vmul.f32 %v68, 0.00390625
      %v70 = vld [vmem:[%s1] sm:$0xff]
      %v71 = vld [vmem:[%s1 + $0x8] sm:$0xff]
      %vm72 = vcmask 130048
      %v74 = vsel %vm72, %v69, 0
      %76 = vmatpush.msra.mxu0 0.0
      %77 = vmatpush.msra.mxu0 0.0
      %78 = vmatpush.msra.mxu0 0.0
      %79 = vmatpush.msra.mxu0 0.0
      %80 = vmatpush.msra.mxu0 0.0
      %81 = vmatpush.msra.mxu0 0.0
      %82 = vmatpush.msra.mxu0 0.0
      %83 = vmatpush.msra.mxu0 0.0
      %84 = vmatpush.msra.mxu0 0.0
      %85 = vmatpush.msra.mxu0 0.0
      %86 = vmatpush.msra.mxu0 0.0
      %87 = vmatpush.msra.mxu0 0.0
      %88 = vmatpush.msra.mxu0 0.0
      %89 = vmatpush.msra.mxu0 0.0
      %90 = vmatpush.msra.mxu0 %v71
      %91 = vmatpush.msra.mxu0 %v70
      %92 = vmatmul.f32.gmra.mxu0 %v74
      %v93 = vpop.f32.mrf.mxu0
      %v94 = vadd.f32 0.0, %v93
      %95 = vdwg.mxu0
      %v96 = vmax.f32 %v94, 0.0
      %v97 = vld [vmem:[%s2] sm:$0xff]
      %v98 = vld [vmem:[%s2 + $0x8] sm:$0xff]
      %v99 = vld [vmem:[%s2 + $0x10] sm:$0xff]
      %v100 = vld [vmem:[%s2 + $0x18] sm:$0xff]
      %v101 = vld [vmem:[%s2 + $0x20] sm:$0xff]
      %v102 = vld [vmem:[%s2 + $0x28] sm:$0xff]
      %v103 = vld [vmem:[%s2 + $0x30] sm:$0xff]
      %v104 = vld [vmem:[%s2 + $0x38] sm:$0xff]
      %v105 = vld [vmem:[%s2 + $0x40] sm:$0xff]
      %v106 = vld [vmem:[%s2 + $0x48] sm:$0xff]
      %v107 = vld [vmem:[%s2 + $0x50] sm:$0xff]
      %v108 = vld [vmem:[%s2 + $0x58] sm:$0xff]
      %v109 = vld [vmem:[%s2 + $0x60] sm:$0xff]
      %v110 = vld [vmem:[%s2 + $0x68] sm:$0xff]
      %v111 = vld [vmem:[%s2 + $0x70] sm:$0xff]
      %v112 = vld [vmem:[%s2 + $0x78] sm:$0xff]
      %v113 = vld [vmem:[%s3] sm:$0x1]
      %v115 = vperm.slane %v113, 0
      %117 = vmatpush.msra.mxu0 %v112
      %118 = vmatpush.msra.mxu0 %v111
      %119 = vmatpush.msra.mxu0 %v110
      %120 = vmatpush.msra.mxu0 %v109
      %121 = vmatpush.msra.mxu0 %v108
      %122 = vmatpush.msra.mxu0 %v107
      %123 = vmatpush.msra.mxu0 %v106
      %124 = vmatpush.msra.mxu0 %v105
      %125 = vmatpush.msra.mxu0 %v104
      %126 = vmatpush.msra.mxu0 %v103
      %127 = vmatpush.msra.mxu0 %v102
      %128 = vmatpush.msra.mxu0 %v101
      %129 = vmatpush.msra.mxu0 %v100
      %130 = vmatpush.msra.mxu0 %v99
      %131 = vmatpush.msra.mxu0 %v98
      %132 = vmatpush.msra.mxu0 %v97
      %133 = vmatmul.f32.gmra.mxu0 %v96
      %v134 = vpop.f32.mrf.mxu0
      %v135 = vadd.f32 %v115, %v134
      %136 = vdwg.mxu0
      %v137 = vsub.f32 0.0, %v135
      %v138 = vmul.f32 %v137, 1.442695
      %v139 = vpow.pop %v138
      %v140 = vadd.f32 %v139, 1.0
      %v141 = vrcp.pop %v140
      %v142 = vmul.f32 %v140, %v141
      %v143 = vsub.f32 1.0, %v142
      %v144 = vmul.f32 %v141, %v143
      %v145 = vadd.f32 %v141, %v144
      %vm146 = vweird.f32 %v140
      %vm147 = vweird.f32 %v141
      %vm148 = vmor %vm146, %vm147
      %v149 = vsel %vm148, %v141, %v145
      %v150 = vand.u32 2147483647, %v140
      %vm151 = vcmp.eq.f32.partialorder %v150, 8.507059e+37
      %v152 = vand.u32 %v140, 2147483648
      %v153 = vor.u32 1.1754944e-38, %v152
      %v154 = vsel %vm151, %v153, %v149
      %v155 = vmul.f32 1.0, %v154
      %156 = vst.msk [vmem:[#allocation3] sm:$0x3] %vm63, %v155
    $region25: #{tpu_custom_call.1} parent=1 // pred_fallthru
      _
    // Predicated region
    $region26: #{tpu_custom_call.1} parent=1 // pred_check
      _
    $region27: #{tpu_custom_call.1} parent=1 // pred_check_branch
      %158 = sbr.rel (0) target = $region29
    $region28: #{tpu_custom_call.1} parent=1 // pred_region
      %160 = vsyncadd [#allocation4], 0
      %s162 = sshll.u32 [#allocation3], 4
      %s163 = int_to_ptr.vmem [resolvable:$true] %s162
      %s164 = sshll.u32 %s4, 4
      %s165 = int_to_ptr.hbm [resolvable:$true] %s164
      %167 = dma.vmem_to_hbm [thread:$0]  %s163, 32, %s165, [#allocation4]
    $region29: #{tpu_custom_call.1} parent=1 // pred_fallthru
      _
    // Predicated region
    $region30: #{tpu_custom_call.1} parent=1 // pred_check
      _
    $region31: #{tpu_custom_call.1} parent=1 // pred_check_branch
      %169 = sbr.rel (0) target = $region33
    $region32: #{tpu_custom_call.1} parent=1 // pred_region
      %171 = dma.done [#allocation4], 32
    $region33: #{tpu_custom_call.1} parent=1 // pred_fallthru
      _
    %172 = vsyncpa [#allocation4], 1

</llo_original>
